<compile_context>
chip_gen: v6e
topology: v6e:2x2x1
jax: 0.10.0
libtpu: 0.0.40
codegen_flags: <defaults>
</compile_context>

<pallas_src>
import functools

import jax
import jax.numpy as jnp
from jax.experimental import pallas as pl
from jax.experimental.pallas import tpu as pltpu

_LANE = 128              # lane width of every block (last dim)
_ROW_TILE_TARGET = 2048  # 2048 rows * 128 lanes * 4 B = 1 MiB per operand block


def _get_beta_schedule(schedule: str, num_timesteps: int) -> jnp.ndarray:
    # Deterministic synthetic schedule (standard DDPM linear schedule).
    if schedule == "linear":
        return jnp.linspace(1e-4, 2e-2, num_timesteps, dtype=jnp.float32)
    raise ValueError(f"unsupported schedule: {schedule}")


def _ddpm_step_kernel(coef_ref, x_ref, eps_ref, z_ref, o_ref):
    """Elementwise folded DDPM posterior step: o = c0*x - c1*eps + c2*z.

    coef_ref : SMEM (3*B,) f32 laid out [c0_0..c0_{B-1}, c1_0.., c2_0..] where
               c0 = 1/sqrt(alpha_t)
               c1 = c0 * beta_t / sqrt(1 - alphas_cumprod_t)
               c2 = sqrt(beta_t) * any(t > 0)     (noise gate folded in)
    x_ref / eps_ref / z_ref / o_ref : VMEM (1, r_tile, 128) tiles.
    """
    b = pl.program_id(0)
    B = coef_ref.shape[0] // 3
    c0 = coef_ref[b]
    c1 = coef_ref[B + b]
    c2 = coef_ref[2 * B + b]

    x = x_ref[...].astype(jnp.float32)
    eps = eps_ref[...].astype(jnp.float32)
    z = z_ref[...].astype(jnp.float32)
    o_ref[...] = (c0 * x - c1 * eps + c2 * z).astype(o_ref.dtype)


class DDPMSamplerPallas:
    """JAX/Pallas port of DDPM_Sampler (forward == step)."""

    def __init__(self, num_timesteps: int = 1000, schedule: str = "linear"):
        self.num_timesteps = num_timesteps
        betas = _get_beta_schedule(schedule, num_timesteps)
        alphas = 1.0 - betas
        alphas_cumprod = jnp.cumprod(alphas)
        self.betas = betas
        self.betas_sqrt = jnp.sqrt(betas)
        self.alphas = alphas
        self.alphas_cumprod = alphas_cumprod
        self.alphas_cumprod_sqrt = jnp.sqrt(alphas_cumprod)
        self.alphas_one_minus_cumprod_sqrt = jnp.sqrt(1.0 - alphas_cumprod)
        self.alphas_sqrt = jnp.sqrt(alphas)
        self.alphas_sqrt_recip = 1.0 / self.alphas_sqrt
        self.alphas_cumprod_prev = jnp.concatenate(
            [jnp.ones((1,), jnp.float32), alphas_cumprod[:-1]]
        )
        self.alphas_cumprod_prev_sqrt = jnp.sqrt(self.alphas_cumprod_prev)

    @functools.partial(jax.jit, static_argnums=0)
    def _step_jit(self, x_t, t, z_t, rng):
        B, C, H, W = x_t.shape
        N = C * H * W
        dtype = x_t.dtype

        # Per-sample folded schedule scalars (tiny SMEM payload).
        c0 = self.alphas_sqrt_recip[t]
        c1 = c0 * self.betas[t] / self.alphas_one_minus_cumprod_sqrt[t]
        gate = jnp.any(t > 0).astype(jnp.float32)   # global gate, as in reference
        c2 = self.betas_sqrt[t] * gate
        coef = jnp.concatenate([c0, c1, c2]).astype(jnp.float32)  # (3*B,) 1-D SMEM

        # z ~ N(0, 1); the all-t==0 case is handled by gating c2 (no full-array select).
        # TODO(synk): could generate noise in-kernel (pltpu.prng_*) to drop one HBM stream.
        z = jax.random.normal(rng, x_t.shape, dtype=dtype)

        # (8,128)-aligned lane-dense layout: (B, rows_pad, 128), block (1, r_tile, 128).
        rows = -(-N // _LANE)
        r_tile = min(_ROW_TILE_TARGET, ((rows + 7) // 8) * 8)
        num_blocks = -(-rows // r_tile)
        rows_pad = num_blocks * r_tile
        n_pad = rows_pad * _LANE

        def to_blocks(a):
            a = a.reshape(B, N)
            if n_pad != N:
                a = jnp.pad(a, ((0, 0), (0, n_pad - N)))
            return a.reshape(B, rows_pad, _LANE)

        x_f, eps_f, z_f = to_blocks(x_t), to_blocks(z_t), to_blocks(z)

        tile_spec = pl.BlockSpec((1, r_tile, _LANE), lambda b, j: (b, j, 0))
        out = pl.pallas_call(
            _ddpm_step_kernel,
            out_shape=jax.ShapeDtypeStruct((B, rows_pad, _LANE), dtype),
            grid_spec=pltpu.PrefetchScalarGridSpec(
                num_scalar_prefetch=0,
                grid=(B, num_blocks),
                in_specs=[
                    pl.BlockSpec(memory_space=pltpu.MemorySpace.SMEM),  # coef
                    tile_spec,  # x_t
                    tile_spec,  # noise prediction z_t
                    tile_spec,  # gaussian noise z
                ],
                out_specs=tile_spec,
            ),
            compiler_params=pltpu.CompilerParams(
                dimension_semantics=("parallel", "parallel")
            ),
        )(coef, x_f, eps_f, z_f)

        out = out.reshape(B, n_pad)[:, :N].reshape(B, C, H, W)
        return out, z

    def step(self, x_t, t, z_t, *, rng):
        """Given noise prediction z_t at x_t, predict x_{t-1}. Returns (x_{t-1}, z)."""
        # NOTE: the PyTorch assert (t < num_timesteps).all() is a host-sync and is
        # intentionally left out of the hot path.
        return self._step_jit(x_t, t, z_t, rng)

    def __call__(self, x_t, t, z_t, *, rng):
        out, _ = self.step(x_t, t, z_t, rng=rng)
        return out


def _reference_step(sampler, x_t, t, z_t, z):
    B = x_t.shape[0]
    beta_t = sampler.betas[t].reshape(B, 1, 1, 1)
    om_sqrt_t = sampler.alphas_one_minus_cumprod_sqrt[t].reshape(B, 1, 1, 1)
    recip_t = sampler.alphas_sqrt_recip[t].reshape(B, 1, 1, 1)
    std_t = sampler.betas_sqrt[t].reshape(B, 1, 1, 1)
    mean = recip_t * (x_t - beta_t * z_t / om_sqrt_t)
    gate = jnp.where(jnp.any(t > 0), 1.0, 0.0)
    return mean + std_t * (z * gate)


if __name__ == "__main__":
    key = jax.random.PRNGKey(0)
    k_x, k_eps, k_z = jax.random.split(key, 3)

    B, C, H, W = 2, 4, 16, 16
    x_t = jax.random.normal(k_x, (B, C, H, W), dtype=jnp.float32)
    z_t = jax.random.normal(k_eps, (B, C, H, W), dtype=jnp.float32)
    t = jnp.array([5, 100], dtype=jnp.int32)

    sampler = DDPMSamplerPallas(num_timesteps=1000, schedule="linear")
    out, z_used = sampler.step(x_t, t, z_t, rng=k_z)
    out = jax.block_until_ready(out)

    ref = _reference_step(sampler, x_t, t, z_t, z_used)
    assert out.shape == (B, C, H, W)
    assert jnp.allclose(out, ref, atol=1e-5, rtol=1e-5)

    print("KERNEL_OK")
</pallas_src>

<mosaic_0001>
module attributes {stable_mosaic.version = 11 : i64} {
  func.func @_ddpm_step_kernel(%arg0: i32, %arg1: i32, %arg2: memref<6xf32, #tpu.memory_space<smem>>, %arg3: memref<1x8x128xf32, #tpu.memory_space<vmem>>, %arg4: memref<1x8x128xf32, #tpu.memory_space<vmem>>, %arg5: memref<1x8x128xf32, #tpu.memory_space<vmem>>, %arg6: memref<1x8x128xf32, #tpu.memory_space<vmem>>) attributes {dimension_semantics = [#tpu.dimension_semantics<parallel>, #tpu.dimension_semantics<parallel>], iteration_bounds = array<i64: 2, 1>, scalar_prefetch = 0 : i64, scratch_operands = 0 : i64, tpu.core_type = #tpu.core_type<tc>, window_params = [{transform_indices = @transform_0, window_bounds = array<i64: 6>}, {transform_indices = @transform_1, window_bounds = array<i64: 1, 8, 128>}, {transform_indices = @transform_2, window_bounds = array<i64: 1, 8, 128>}, {transform_indices = @transform_3, window_bounds = array<i64: 1, 8, 128>}, {transform_indices = @transform_4, window_bounds = array<i64: 1, 8, 128>}]} {
    %0 = arith.index_cast %arg0 : i32 to index
    %1 = memref.load %arg2[%0] : memref<6xf32, #tpu.memory_space<smem>>
    %c2_i32 = arith.constant 2 : i32
    %2 = arith.addi %c2_i32, %arg0 : i32
    %3 = arith.index_cast %2 : i32 to index
    %4 = memref.load %arg2[%3] : memref<6xf32, #tpu.memory_space<smem>>
    %c4_i32 = arith.constant 4 : i32
    %5 = arith.addi %c4_i32, %arg0 : i32
    %6 = arith.index_cast %5 : i32 to index
    %7 = memref.load %arg2[%6] : memref<6xf32, #tpu.memory_space<smem>>
    %c0 = arith.constant 0 : index
    %c0_0 = arith.constant 0 : index
    %c0_1 = arith.constant 0 : index
    %8 = vector.load %arg3[%c0, %c0_0, %c0_1] : memref<1x8x128xf32, #tpu.memory_space<vmem>>, vector<1x8x128xf32>
    %c0_2 = arith.constant 0 : index
    %c0_3 = arith.constant 0 : index
    %c0_4 = arith.constant 0 : index
    %9 = vector.load %arg4[%c0_2, %c0_3, %c0_4] : memref<1x8x128xf32, #tpu.memory_space<vmem>>, vector<1x8x128xf32>
    %c0_5 = arith.constant 0 : index
    %c0_6 = arith.constant 0 : index
    %c0_7 = arith.constant 0 : index
    %10 = vector.load %arg5[%c0_5, %c0_6, %c0_7] : memref<1x8x128xf32, #tpu.memory_space<vmem>>, vector<1x8x128xf32>
    %11 = vector.broadcast %1 : f32 to vector<1x8x128xf32>
    %12 = arith.mulf %11, %8 : vector<1x8x128xf32>
    %13 = vector.broadcast %4 : f32 to vector<1x8x128xf32>
    %14 = arith.mulf %13, %9 : vector<1x8x128xf32>
    %15 = arith.subf %12, %14 : vector<1x8x128xf32>
    %16 = vector.broadcast %7 : f32 to vector<1x8x128xf32>
    %17 = arith.mulf %16, %10 : vector<1x8x128xf32>
    %18 = arith.addf %15, %17 : vector<1x8x128xf32>
    %c0_8 = arith.constant 0 : index
    %c0_9 = arith.constant 0 : index
    %c0_10 = arith.constant 0 : index
    %19 = vector.load %arg6[%c0_8, %c0_9, %c0_10] : memref<1x8x128xf32, #tpu.memory_space<vmem>>, vector<1x8x128xf32>
    tpu.vector_store %arg6[%c0_8, %c0_9, %c0_10], %18 {strides = array<i32>} : memref<1x8x128xf32, #tpu.memory_space<vmem>>, vector<1x8x128xf32>,
    return
  }
  func.func @transform_0(%arg0: i32, %arg1: i32) -> i32 {
    %c0_i32 = arith.constant 0 : i32
    %c0_i32_0 = arith.constant 0 : i32
    return %c0_i32 : i32
  }
  func.func @transform_1(%arg0: i32, %arg1: i32) -> (i32, i32, i32) {
    %c0_i32 = arith.constant 0 : i32
    %c0_i32_0 = arith.constant 0 : i32
    return %arg0, %arg1, %c0_i32 : i32, i32, i32
  }
  func.func @transform_2(%arg0: i32, %arg1: i32) -> (i32, i32, i32) {
    %c0_i32 = arith.constant 0 : i32
    %c0_i32_0 = arith.constant 0 : i32
    return %arg0, %arg1, %c0_i32 : i32, i32, i32
  }
  func.func @transform_3(%arg0: i32, %arg1: i32) -> (i32, i32, i32) {
    %c0_i32 = arith.constant 0 : i32
    %c0_i32_0 = arith.constant 0 : i32
    return %arg0, %arg1, %c0_i32 : i32, i32, i32
  }
  func.func @transform_4(%arg0: i32, %arg1: i32) -> (i32, i32, i32) {
    %c0_i32 = arith.constant 0 : i32
    %c0_i32_0 = arith.constant 0 : i32
    return %arg0, %arg1, %c0_i32 : i32, i32, i32
  }
}

</mosaic_0001>

<llo_original>
// kernel: _step_jit.1
$region0: #{_step_jit.1}
  #allocation0 [shape = 'u32[]', space=smem, size = 0x4, offset = 0x4, fixed_abs, tag = 'smem constant byte address 0x4 - core index']
  #allocation1 [shape = 'u32[144,128]{1,0:T(1,128)}', space=vmem, size = 0x12000, scoped, tag = 'internal scratch']
  %s0 = inlined_call_operand.vmem [shape: f32[6], index: 0, kind: input, shape index: {}]
  %s1 = inlined_call_operand.vmem [shape: f32[2,8,128], index: 1, kind: input, shape index: {}]
  %s2 = inlined_call_operand.vmem [shape: f32[2,8,128], index: 2, kind: input, shape index: {}]
  %s3 = inlined_call_operand.vmem [shape: f32[2,8,128], index: 3, kind: input, shape index: {}]
  %s4 = inlined_call_operand.vmem [shape: f32[2,8,128], index: 4, kind: output, shape index: {}]
  %s5 = sld [smem:[#allocation0]]
  $region53: #{_step_jit.1} parent=0
    _
  %s7 = ssub.s32 1, %s5
  %s8 = scalar_select 0, %s7, %s5
  $region1: #{_step_jit.1} parent=0
    #allocation2 [shape = 'u8[512]{0}', space=smem, size = 0x200, scoped, tag = 'input window, operand 0, single buffered']
    #allocation3 [shape = 's32[2]{0}', space=sflag, size = 0x8, scoped, tag = 'scoped memory for _step_jit.1']
    %9 = vsyncpa [#allocation3], 0
    loop: start=0, step=1, limit=4
    $region2: #{_step_jit.1} parent=1 // loop_pre_header
      _
    $region3: #{_step_jit.1} parent=1 // loop_header
      %s11 = sphi 0, %s15
      %p12 = scmp.ge.s32.totalorder %s11, 4
      %s18 = sphi 0, %s30
      %s19 = sphi 0, %s26
      %s20 = sphi 0, %s18
      %s21 = sphi 0, %s19
      %s22 = sphi 0, %s20
      %s23 = sphi 0, %s21
      %s31 = sphi 0, %s31
      %s33 = sphi 0, %s31
      %s34 = sphi 0, %s33
      %s48 = sphi 0, %s34
      %s56 = sphi 0, %s58
      %s59 = sphi 0, %s56
      %s60 = sphi 0, %s59
      %s76 = sphi 0, %s60
      %s84 = sphi 0, %s86
      %s87 = sphi 0, %s84
      %s88 = sphi 0, %s87
      %s104 = sphi 0, %s88
      %s112 = sphi 0, %s114
      %s115 = sphi 0, %s112
      %s116 = sphi 0, %s115
      %s132 = sphi 0, %s116
      %s140 = sphi 0, %s142
      %s143 = sphi 0, %s140
      %s144 = sphi 0, %s143
      %s160 = sphi 0, %s144
    $region4: #{_step_jit.1} parent=1 // loop_header_branch
      %14 = sbr.rel (%p12) target = $region8
    $region5: #{_step_jit.1} parent=1 // loop_body
      %s16 = ssub.s32 %s11, 1
      %s17 = ssub.s32 %s11, 2
      %s24 = sadd.s32 1, %s19
      %p25 = scmp.ge.s32.totalorder %s24, 1
      %s26 = scalar_select %p25, 0, %s24
      %s27 = sadd.s32 1, %s18
      %s28 = scalar_select %p25, %s27, %s18
      %p29 = scmp.ge.s32.totalorder %s28, 2
      %s30 = scalar_select %p29, 0, %s28
      %s32 = sadd.s32 %s31, 1
      %p35 = scmp.eq.s32.totalorder %s11, 1
      %p36 = scmp.ne.s32.totalorder %s31, %s33
      %p37 = scmp.eq.s32.totalorder %s11, 0
      %p38 = por %p36, %p37
      %p39 = scmp.ne.s32.totalorder %s31, %s33
      %p40 = scmp.eq.s32.totalorder %s16, 1
      %p41 = por %p39, %p40
      %p42 = scmp.ne.s32.totalorder %s33, %s34
      %p43 = scmp.eq.s32.totalorder %s16, 0
      %p44 = por %p42, %p43
      %p45 = scmp.ne.s32.totalorder %s33, %s34
      %p46 = scmp.eq.s32.totalorder %s17, 1
      %p47 = por %p45, %p46
      %p49 = scmp.ne.s32.totalorder %s34, %s48
      %p50 = scmp.eq.s32.totalorder %s17, 0
      %p51 = por %p49, %p50
      %s52 = ssub.s32 %s18, %s30
      %s53 = ssub.s32 %s19, %s26
      %s54 = sor.u32 %s52, %s53
      %p55 = scmp.eq.s32.totalorder %s54, 0
      %s57 = sadd.s32 %s56, 1
      %s58 = scalar_select %p55, %s56, %s57
      %p61 = pneg %p55
      %p62 = scmp.eq.s32.totalorder %s11, 1
      %p63 = por %p61, %p62
      %p64 = scmp.ne.s32.totalorder %s56, %s59
      %p65 = scmp.eq.s32.totalorder %s11, 0
      %p66 = por %p64, %p65
      %p67 = scmp.ne.s32.totalorder %s56, %s59
      %p68 = scmp.eq.s32.totalorder %s16, 1
      %p69 = por %p67, %p68
      %p70 = scmp.ne.s32.totalorder %s59, %s60
      %p71 = scmp.eq.s32.totalorder %s16, 0
      %p72 = por %p70, %p71
      %p73 = scmp.ne.s32.totalorder %s59, %s60
      %p74 = scmp.eq.s32.totalorder %s17, 1
      %p75 = por %p73, %p74
      %p77 = scmp.ne.s32.totalorder %s60, %s76
      %p78 = scmp.eq.s32.totalorder %s17, 0
      %p79 = por %p77, %p78
      %s80 = ssub.s32 %s18, %s30
      %s81 = ssub.s32 %s19, %s26
      %s82 = sor.u32 %s80, %s81
      %p83 = scmp.eq.s32.totalorder %s82, 0
      %s85 = sadd.s32 %s84, 1
      %s86 = scalar_select %p83, %s84, %s85
      %p89 = pneg %p83
      %p90 = scmp.eq.s32.totalorder %s11, 1
      %p91 = por %p89, %p90
      %p92 = scmp.ne.s32.totalorder %s84, %s87
      %p93 = scmp.eq.s32.totalorder %s11, 0
      %p94 = por %p92, %p93
      %p95 = scmp.ne.s32.totalorder %s84, %s87
      %p96 = scmp.eq.s32.totalorder %s16, 1
      %p97 = por %p95, %p96
      %p98 = scmp.ne.s32.totalorder %s87, %s88
      %p99 = scmp.eq.s32.totalorder %s16, 0
      %p100 = por %p98, %p99
      %p101 = scmp.ne.s32.totalorder %s87, %s88
      %p102 = scmp.eq.s32.totalorder %s17, 1
      %p103 = por %p101, %p102
      %p105 = scmp.ne.s32.totalorder %s88, %s104
      %p106 = scmp.eq.s32.totalorder %s17, 0
      %p107 = por %p105, %p106
      %s108 = ssub.s32 %s18, %s30
      %s109 = ssub.s32 %s19, %s26
      %s110 = sor.u32 %s108, %s109
      %p111 = scmp.eq.s32.totalorder %s110, 0
      %s113 = sadd.s32 %s112, 1
      %s114 = scalar_select %p111, %s112, %s113
      %p117 = pneg %p111
      %p118 = scmp.eq.s32.totalorder %s11, 1
      %p119 = por %p117, %p118
      %p120 = scmp.ne.s32.totalorder %s112, %s115
      %p121 = scmp.eq.s32.totalorder %s11, 0
      %p122 = por %p120, %p121
      %p123 = scmp.ne.s32.totalorder %s112, %s115
      %p124 = scmp.eq.s32.totalorder %s16, 1
      %p125 = por %p123, %p124
      %p126 = scmp.ne.s32.totalorder %s115, %s116
      %p127 = scmp.eq.s32.totalorder %s16, 0
      %p128 = por %p126, %p127
      %p129 = scmp.ne.s32.totalorder %s115, %s116
      %p130 = scmp.eq.s32.totalorder %s17, 1
      %p131 = por %p129, %p130
      %p133 = scmp.ne.s32.totalorder %s116, %s132
      %p134 = scmp.eq.s32.totalorder %s17, 0
      %p135 = por %p133, %p134
      %s136 = ssub.s32 %s18, %s30
      %s137 = ssub.s32 %s19, %s26
      %s138 = sor.u32 %s136, %s137
      %p139 = scmp.eq.s32.totalorder %s138, 0
      %s141 = sadd.s32 %s140, 1
      %s142 = scalar_select %p139, %s140, %s141
      %p145 = pneg %p139
      %p146 = scmp.eq.s32.totalorder %s11, 1
      %p147 = por %p145, %p146
      %p148 = scmp.ne.s32.totalorder %s140, %s143
      %p149 = scmp.eq.s32.totalorder %s11, 0
      %p150 = por %p148, %p149
      %p151 = scmp.ne.s32.totalorder %s140, %s143
      %p152 = scmp.eq.s32.totalorder %s16, 1
      %p153 = por %p151, %p152
      %p154 = scmp.ne.s32.totalorder %s143, %s144
      %p155 = scmp.eq.s32.totalorder %s16, 0
      %p156 = por %p154, %p155
      %p157 = scmp.ne.s32.totalorder %s143, %s144
      %p158 = scmp.eq.s32.totalorder %s17, 1
      %p159 = por %p157, %p158
      %p161 = scmp.ne.s32.totalorder %s144, %s160
      %p162 = scmp.eq.s32.totalorder %s17, 0
      %p163 = por %p161, %p162
      %p164 = scmp.le.s32.totalorder 1, %s11
      %p165 = scmp.lt.s32.totalorder %s11, 3
      %p166 = pnand %p164, %p165
      %p167 = pneg %p166
      // Predicated region
      $region9: #{_step_jit.1} parent=5 // pred_check
        _
      $region10: #{_step_jit.1} parent=5 // pred_check_branch
        %169 = sbr.rel (%p166) target = $region12
      $region11: #{_step_jit.1} parent=5 // pred_region
        %s170 = ssub.s32 %s11, 1
        // Predicated region
        $region13: #{_step_jit.1} parent=11 // pred_check
          %p171 = pneg %p44
        $region14: #{_step_jit.1} parent=11 // pred_check_branch
          %173 = sbr.rel (%p171) target = $region16
        $region15: #{_step_jit.1} parent=11 // pred_region
          %s175 = ssub.s32 16, 16
          %176 = vsyncadd [#allocation3], %s175
          %s178 = sshll.u32 %s0, 4
          %s179 = int_to_ptr.vmem [resolvable:$true] %s178
          %181 = dma.vmem_to_smem %s179, 16, [#allocation2], [#allocation3]
        $region16: #{_step_jit.1} parent=11 // pred_fallthru
          _
      $region12: #{_step_jit.1} parent=5 // pred_fallthru
        _
      %p182 = scmp.lt.s32.totalorder %s11, 2
      // Predicated region
      $region17: #{_step_jit.1} parent=5 // pred_check
        %p183 = pneg %p182
      $region18: #{_step_jit.1} parent=5 // pred_check_branch
        %185 = sbr.rel (%p183) target = $region20
      $region19: #{_step_jit.1} parent=5 // pred_region
        // Predicated region
        $region21: #{_step_jit.1} parent=19 // pred_check
          %p186 = pneg %p66
        $region22: #{_step_jit.1} parent=19 // pred_check_branch
          %188 = sbr.rel (%p186) target = $region24
        $region23: #{_step_jit.1} parent=19 // pred_region
          %p189 = scmp.lt.s32.totalorder %s18, 1
          %s190 = scalar_select %p189, %s18, 1
          %p191 = scmp.lt.s32.totalorder %s19, 0
          %s192 = scalar_select %p191, %s19, 0
          %s193 = sadd.s32 %s192, %s190
          %s194 = smul.addr %s193, 8
          %s195 = scalar_lea.vmem %s1, %s194
        $region24: #{_step_jit.1} parent=19 // pred_fallthru
          _
        // Predicated region
        $region25: #{_step_jit.1} parent=19 // pred_check
          %p196 = pneg %p94
        $region26: #{_step_jit.1} parent=19 // pred_check_branch
          %198 = sbr.rel (%p196) target = $region28
        $region27: #{_step_jit.1} parent=19 // pred_region
          %p199 = scmp.lt.s32.totalorder %s18, 1
          %s200 = scalar_select %p199, %s18, 1
          %p201 = scmp.lt.s32.totalorder %s19, 0
          %s202 = scalar_select %p201, %s19, 0
          %s203 = sadd.s32 %s202, %s200
          %s204 = smul.addr %s203, 8
          %s205 = scalar_lea.vmem %s2, %s204
        $region28: #{_step_jit.1} parent=19 // pred_fallthru
          _
        // Predicated region
        $region29: #{_step_jit.1} parent=19 // pred_check
          %p206 = pneg %p122
        $region30: #{_step_jit.1} parent=19 // pred_check_branch
          %208 = sbr.rel (%p206) target = $region32
        $region31: #{_step_jit.1} parent=19 // pred_region
          %p209 = scmp.lt.s32.totalorder %s18, 1
          %s210 = scalar_select %p209, %s18, 1
          %p211 = scmp.lt.s32.totalorder %s19, 0
          %s212 = scalar_select %p211, %s19, 0
          %s213 = sadd.s32 %s212, %s210
          %s214 = smul.addr %s213, 8
          %s215 = scalar_lea.vmem %s3, %s214
        $region32: #{_step_jit.1} parent=19 // pred_fallthru
          _
      $region20: #{_step_jit.1} parent=5 // pred_fallthru
        _
      %p216 = scmp.le.s32.totalorder 1, %s11
      %p217 = scmp.lt.s32.totalorder %s11, 3
      %p218 = pnand %p216, %p217
      %p219 = pneg %p218
      // Predicated region
      $region33: #{_step_jit.1} parent=5 // pred_check
        _
      $region34: #{_step_jit.1} parent=5 // pred_check_branch
        %221 = sbr.rel (%p218) target = $region36
      $region35: #{_step_jit.1} parent=5 // pred_region
        %s222 = ssub.s32 %s11, 1
        // Predicated region
        $region37: #{_step_jit.1} parent=35 // pred_check
          %p223 = pneg %p44
        $region38: #{_step_jit.1} parent=35 // pred_check_branch
          %225 = sbr.rel (%p223) target = $region40
        $region39: #{_step_jit.1} parent=35 // pred_region
          %226 = dma.done [#allocation3], 16
        $region40: #{_step_jit.1} parent=35 // pred_fallthru
          _
        %227 = sfence
        %p228 = pneg %p44
        %p229 = pneg %p41
        %p230 = scmp.lt.s32.totalorder %s20, 1
        %s231 = scalar_select %p230, %s20, 1
        %p232 = scmp.lt.s32.totalorder %s21, 0
        %s233 = scalar_select %p232, %s21, 0
        %s234 = sadd.s32 %s233, %s231
        %s235 = smul.addr %s234, 8
        %s236 = scalar_lea.vmem %s1, %s235
        %p237 = pneg %p72
        %p238 = pneg %p69
        %p239 = scmp.lt.s32.totalorder %s20, 1
        %s240 = scalar_select %p239, %s20, 1
        %p241 = scmp.lt.s32.totalorder %s21, 0
        %s242 = scalar_select %p241, %s21, 0
        %s243 = sadd.s32 %s242, %s240
        %s244 = smul.addr %s243, 8
        %s245 = scalar_lea.vmem %s2, %s244
        %p246 = pneg %p100
        %p247 = pneg %p97
        %p248 = scmp.lt.s32.totalorder %s20, 1
        %s249 = scalar_select %p248, %s20, 1
        %p250 = scmp.lt.s32.totalorder %s21, 0
        %s251 = scalar_select %p250, %s21, 0
        %s252 = sadd.s32 %s251, %s249
        %s253 = smul.addr %s252, 8
        %s254 = scalar_lea.vmem %s3, %s253
        %p255 = pneg %p128
        %p256 = pneg %p125
        %p257 = pneg %p156
        %p258 = pneg %p153
        %p259 = scmp.lt.s32.totalorder %s20, 1
        %s260 = scalar_select %p259, %s20, 1
        %p261 = scmp.lt.s32.totalorder %s21, 0
        %s262 = scalar_select %p261, %s21, 0
        %s263 = sadd.s32 %s262, %s260
        %s264 = smul.addr %s263, 8
        %s265 = scalar_lea.vmem %s4, %s264
        %p266 = scmp.lt.s32.totalorder %s20, 1
        %s267 = scalar_select %p266, %s20, 1
        %p268 = scmp.lt.s32.totalorder %s21, 0
        %s269 = scalar_select %p268, %s21, 0
        %s270 = sadd.s32 %s269, %s267
        %s271 = smul.addr %s270, 8
        %s272 = scalar_lea.vmem %s1, %s271
        %p273 = scmp.lt.s32.totalorder %s20, 1
        %s274 = scalar_select %p273, %s20, 1
        %p275 = scmp.lt.s32.totalorder %s21, 0
        %s276 = scalar_select %p275, %s21, 0
        %s277 = sadd.s32 %s276, %s274
        %s278 = smul.addr %s277, 8
        %s279 = scalar_lea.vmem %s2, %s278
        %p280 = scmp.lt.s32.totalorder %s20, 1
        %s281 = scalar_select %p280, %s20, 1
        %p282 = scmp.lt.s32.totalorder %s21, 0
        %s283 = scalar_select %p282, %s21, 0
        %s284 = sadd.s32 %s283, %s281
        %s285 = smul.addr %s284, 8
        %s286 = scalar_lea.vmem %s3, %s285
        %p287 = scmp.lt.s32.totalorder %s20, 1
        %s288 = scalar_select %p287, %s20, 1
        %p289 = scmp.lt.s32.totalorder %s21, 0
        %s290 = scalar_select %p289, %s21, 0
        %s291 = sadd.s32 %s290, %s288
        %s292 = smul.addr %s291, 8
        %s293 = scalar_lea.vmem %s4, %s292
        %s294 = sld [smem:[#allocation2 + %s20]]
        %s295 = sadd.s32 %s20, 2
        %s296 = sld [smem:[#allocation2 + %s295]]
        %s297 = sadd.s32 %s20, 4
        %s298 = sld [smem:[#allocation2 + %s297]]
        %v299 = vld [vmem:[%s272] sm:$0xff]
        %v300 = vld [vmem:[%s279] sm:$0xff]
        %v301 = vld [vmem:[%s286] sm:$0xff]
        %v302 = vstv %s294
        %v303 = vmul.f32 %v302, %v299
        %v304 = vstv %s296
        %v305 = vmul.f32 %v304, %v300
        %v306 = vsub.f32 %v303, %v305
        %v307 = vstv %s298
        %v308 = vmul.f32 %v307, %v301
        %v309 = vadd.f32 %v306, %v308
        %310 = vst [vmem:[%s293] sm:$0xff] %v309
        %p311 = scmp.lt.s32.totalorder %s20, 1
        %s312 = scalar_select %p311, %s20, 1
        %p313 = scmp.lt.s32.totalorder %s21, 0
        %s314 = scalar_select %p313, %s21, 0
        %s315 = sadd.s32 %s314, %s312
        %s316 = smul.addr %s315, 8
        %s317 = scalar_lea.vmem %s4, %s316
        // Predicated region
        $region41: #{_step_jit.1} parent=35 // pred_check
          %p318 = pneg %p153
        $region42: #{_step_jit.1} parent=35 // pred_check_branch
          %320 = sbr.rel (%p318) target = $region44
        $region43: #{_step_jit.1} parent=35 // pred_region
          _
        $region44: #{_step_jit.1} parent=35 // pred_fallthru
          _
      $region36: #{_step_jit.1} parent=5 // pred_fallthru
        _
      %p321 = scmp.le.s32.totalorder 2, %s11
      // Predicated region
      $region45: #{_step_jit.1} parent=5 // pred_check
        %p322 = pneg %p321
      $region46: #{_step_jit.1} parent=5 // pred_check_branch
        %324 = sbr.rel (%p322) target = $region48
      $region47: #{_step_jit.1} parent=5 // pred_region
        %s325 = ssub.s32 %s11, 2
        // Predicated region
        $region49: #{_step_jit.1} parent=47 // pred_check
          %p326 = pneg %p159
        $region50: #{_step_jit.1} parent=47 // pred_check_branch
          %328 = sbr.rel (%p326) target = $region52
        $region51: #{_step_jit.1} parent=47 // pred_region
          %p329 = scmp.lt.s32.totalorder %s22, 1
          %s330 = scalar_select %p329, %s22, 1
          %p331 = scmp.lt.s32.totalorder %s23, 0
          %s332 = scalar_select %p331, %s23, 0
          %s333 = sadd.s32 %s332, %s330
          %s334 = smul.addr %s333, 8
          %s335 = scalar_lea.vmem %s4, %s334
        $region52: #{_step_jit.1} parent=47 // pred_fallthru
          _
      $region48: #{_step_jit.1} parent=5 // pred_fallthru
        _
    $region6: #{_step_jit.1} parent=1 // loop_footer
      %s15 = sadd.s32 1, %s11
    $region7: #{_step_jit.1} parent=1 // loop_footer_branch
      %10 = sbr.rel target = $region3
    $region8: #{_step_jit.1} parent=1 // loop_exit
      _
    %336 = vsyncpa [#allocation3], 1
    %s337 = scalar_lea.sflag [#allocation3], 1
    %338 = vsyncpa %s337, 1

</llo_original>
